<compile_context>
chip_gen: v5e
topology: v5e:2x2
jax: 0.10.0
libtpu: 0.0.40
codegen_flags: <defaults>
</compile_context>

<pallas_src>
import functools

import numpy as np

import jax
import jax.numpy as jnp
from jax import lax
from jax.experimental import pallas as pl
from jax.experimental.pallas import tpu as pltpu


# --------------------------------------------------------------------------- #
# Kernel
# --------------------------------------------------------------------------- #
def _tv_tile_kernel(w, p_total, ragged, x_ref, m_ref, o_ref, carry_ref):
    """One (plane-tile, row-chunk) step of the TV |grad| sum.

    x_ref:     (tile_p, chunk)  image rows, flattened row-major on lanes
               (chunk is a multiple of W; chunk starts on a row boundary).
    m_ref:     (2, chunk) f32 resident masks: [0]=left-tap-valid (x>0),
               [1]=not-first-row-of-chunk.
    o_ref:     (1, 8, 128) f32, per-plane-tile partial sum (accumulated over
               the chunk grid axis, broadcast over the block).
    carry_ref: (tile_p, W) f32 scratch: last image row of the previous chunk.
    """
    ci = pl.program_id(1)
    x = x_ref[...].astype(jnp.float32)
    tp, chunk = x.shape

    if ragged:
        # Last plane tile may extend past the array; zero the invalid planes
        # (select, not multiply, so stale-VMEM NaNs cannot leak through).
        pi = pl.program_id(0)
        row = lax.broadcasted_iota(jnp.int32, (tp, 1), 0)
        x = jnp.where(pi * tp + row < p_total, x, 0.0)

    left_valid = m_ref[0:1, :]          # (1, chunk), 0.0 in the first image column
    not_first = m_ref[1:2, :]           # (1, chunk), 0.0 in the chunk's first row

    # 3-tap stencil: two XLU lane rolls + a handful of VALU ops.
    left = pltpu.roll(x, shift=1, axis=1) * left_valid      # (y, x-1) tap
    up = pltpu.roll(x, shift=w, axis=1)                      # (y-1, x) tap (wrapped in row 0)
    g = up + left - 2.0 * x
    abs_int = jnp.abs(g) * not_first                          # chunk row 0 handled below

    # Long reduction on the idle MXU: contract over the plane/sublane axis with a
    # tiny ones(1, tp) operand, leaving only a (1, chunk) row to fold.
    if tp == 1:
        col = abs_int
    else:
        ones_row = jnp.ones((1, tp), jnp.float32)
        col = jnp.dot(ones_row, abs_int, preferred_element_type=jnp.float32)

    # First row of this chunk: its (y-1, x) tap is the previous chunk's last row,
    # or the conv zero padding when ci == 0.
    @pl.when(ci == 0)
    def _():
        carry_ref[...] = jnp.zeros_like(carry_ref)

    g0 = carry_ref[...] + left[:, :w] - 2.0 * x[:, :w]        # (tile_p, W), tiny
    carry_ref[...] = x[:, chunk - w:]                          # last row for next chunk

    partial = jnp.sum(col) + jnp.sum(jnp.abs(g0))

    @pl.when(ci == 0)
    def _():
        o_ref[...] = jnp.zeros_like(o_ref)
    o_ref[...] += partial


# --------------------------------------------------------------------------- #
# Tiling / launch helpers
# --------------------------------------------------------------------------- #
def _vmem_capacity_bytes():
    try:
        return int(pltpu.get_tpu_info().vmem_capacity_bytes)
    except Exception:
        return 64 * 1024 * 1024          # v7x per-TensorCore VMEM; safe lower bound


def _default_tile_bytes(vmem_cap):
    # ~1/16 of VMEM for the input tile leaves room for double buffering plus the
    # f32 roll/grad temporaries: ~4 MiB on 64 MiB v7x, ~8 MiB on 128 MiB v5e/v6e.
    return int(min(max(vmem_cap // 16, 2 * 1024 * 1024), 8 * 1024 * 1024))


def _choose_tiling(p_total, h, w, itemsize, tile_bytes):
    """Returns (tile_p, chunk): planes per tile and lanes per hw chunk."""
    hw = h * w
    min_tp = min(p_total, 8)             # sublane-aligned minimum plane tile

    # Whole planes if they fit, else row-blocks (multiple of W, 128-lane aligned).
    if min_tp * hw * itemsize <= tile_bytes:
        chunk = hw
    else:
        chunk = None
        for r in range(h, 0, -1):        # largest feasible row block
            if h % r:
                continue
            c = r * w
            if c != hw and c % 128 != 0:
                continue
            if min_tp * c * itemsize <= tile_bytes:
                chunk = c
                break
        if chunk is None:
            # TODO(synk): no 128-aligned row block fits the budget (exotic W);
            # fall back to whole planes and let the raised vmem limit absorb it.
            chunk = hw

    cap = max(tile_bytes // (chunk * itemsize), 1)
    if cap >= p_total:
        if p_total >= 16:
            # Split into (at least) two plane tiles so the 'parallel' grid axis
            # can shard across both v7x TensorCores; one extra grid step (~0.35us)
            # is noise on single-core v5e/v6e.
            half = (p_total + 1) // 2
            tile_p = min(((half + 7) // 8) * 8, p_total)
        else:
            tile_p = p_total
    else:
        tile_p = min(max(min_tp, (cap // 8) * 8), p_total)
    return tile_p, chunk


def _make_masks(w, chunk):
    k = np.arange(chunk)
    left_valid = (k % w != 0).astype(np.float32)     # (y, x-1) tap exists
    not_first_row = (k >= w).astype(np.float32)      # rows >= 1 within the chunk
    return jnp.asarray(np.stack([left_valid, not_first_row], axis=0))


def _tv_sum_abs_grad(planes, h, w, tile_bytes, vmem_cap):
    """planes: (P, H*W). Returns sum over all planes of sum|grad(plane)|."""
    p_total, hw = planes.shape
    itemsize = planes.dtype.itemsize

    tile_p, chunk = _choose_tiling(p_total, h, w, itemsize, tile_bytes)
    num_p_tiles = pl.cdiv(p_total, tile_p)
    num_chunks = hw // chunk
    ragged = (p_total % tile_p) != 0

    masks = _make_masks(w, chunk)

    # Right-size the scoped VMEM limit: double-buffered input tile plus the f32
    # roll/grad temporaries plus masks/output/scratch slack.
    tile_in_bytes = tile_p * chunk * itemsize
    tile_f32_bytes = tile_p * chunk * 4
    needed = 2 * tile_in_bytes + 6 * tile_f32_bytes + 4 * 2 * chunk * 4 + (2 << 20)
    vmem_limit = int(min(max(needed, 32 * 1024 * 1024), vmem_cap))

    elems = p_total * hw
    cost = pl.CostEstimate(
        flops=10 * elems,
        transcendentals=0,
        bytes_accessed=elems * itemsize + 2 * chunk * 4 + num_p_tiles * 8 * 128 * 4)

    out = pl.pallas_call(
        functools.partial(_tv_tile_kernel, w, p_total, ragged),
        out_shape=jax.ShapeDtypeStruct((num_p_tiles, 8, 128), jnp.float32),
        grid=(num_p_tiles, num_chunks),
        in_specs=[
            pl.BlockSpec((tile_p, chunk), lambda pi, ci: (pi, ci)),   # image rows
            pl.BlockSpec((2, chunk), lambda pi, ci: (0, 0)),          # resident masks
        ],
        out_specs=pl.BlockSpec((1, 8, 128), lambda pi, ci: (pi, 0, 0)),
        scratch_shapes=[pltpu.VMEM((tile_p, w), jnp.float32)],        # row carry
        compiler_params=pltpu.CompilerParams(
            dimension_semantics=("parallel", "arbitrary"),
            vmem_limit_bytes=vmem_limit),
        cost_estimate=cost,
    )(planes, masks)

    return jnp.sum(out[:, 0, 0])


# --------------------------------------------------------------------------- #
# Public API (matches the nn.Module forward)
# --------------------------------------------------------------------------- #
def make_tv_kernel_buffer(c_img=1):
    """Deterministic replica of the registered buffer: (c_img, 1, 3, 3)."""
    stencil = jnp.array([[0.0, 1.0, 0.0],
                         [1.0, -2.0, 0.0],
                         [0.0, 0.0, 0.0]], dtype=jnp.float32)
    return jnp.broadcast_to(stencil[None, None], (c_img, 1, 3, 3))


def total_variation_loss(results, kernel=None, *, tile_bytes=None):
    """results: list of (N, H, W) arrays (pre-unsqueeze), f32 or bf16.

    `kernel` is accepted for API parity with the nn.Module's registered buffer;
    it is fixed and non-learnable, so the 3-tap stencil is a compile-time
    constant inside the Pallas kernel.  One pallas_call per result (no host-side
    concat/pad copies); the per-result mean is applied outside the kernel.
    bf16 results are read directly and upcast in-register (f32 accumulation).
    """
    del kernel
    vmem_cap = _vmem_capacity_bytes()
    if tile_bytes is None:
        tile_bytes = _default_tile_bytes(vmem_cap)

    loss = jnp.float32(0.0)
    for res in results:
        x = res[:, None, :, :]                        # unsqueeze(1): (N, 1, H, W)
        n, c, h, w = x.shape
        planes = x.reshape(n * c, h * w)              # free reshape; planes on sublanes
        total = _tv_sum_abs_grad(planes, h, w, tile_bytes, vmem_cap)
        loss = loss + total / jnp.float32(n * c * h * w)   # torch.mean denominator
    return loss


def _reference_loss(results):
    """Pure-JAX reference (explicit zero-padded 3-tap cross-correlation)."""
    loss = jnp.float32(0.0)
    for res in results:
        x = res[:, None, :, :].astype(jnp.float32)
        h, w = x.shape[2], x.shape[3]
        xp = jnp.pad(x, ((0, 0), (0, 0), (1, 1), (1, 1)))
        grad = (xp[:, :, 0:h, 1:w + 1]          # weight[0,1] -> input[y-1, x]
                + xp[:, :, 1:h + 1, 0:w]        # weight[1,0] -> input[y, x-1]
                - 2.0 * xp[:, :, 1:h + 1, 1:w + 1])
        loss = loss + jnp.mean(jnp.abs(grad))
    return loss


if __name__ == "__main__":
    key = jax.random.PRNGKey(0)
    ks = jax.random.split(key, 5)
    # "results" (pre-unsqueeze (N, H, W)) exercising: single-tile, >=16-plane split
    # (ragged last tile), tiny image, a wider plane, and a bf16 input.
    results = [
        jax.random.normal(ks[0], (9, 16, 16), dtype=jnp.float32),
        jax.random.normal(ks[1], (18, 16, 16), dtype=jnp.float32),
        jax.random.normal(ks[2], (1, 8, 16), dtype=jnp.float32),
        jax.random.normal(ks[3], (2, 32, 128), dtype=jnp.float32),
        jax.random.normal(ks[4], (4, 16, 16), dtype=jnp.float32).astype(jnp.bfloat16),
    ]
    kernel = make_tv_kernel_buffer(c_img=1)

    ref = jax.block_until_ready(_reference_loss(results))

    # Default device-derived tile budget (single-tile fast paths).
    loss = jax.block_until_ready(total_variation_loss(results, kernel))
    # Tiny tile budget: forces ragged plane tiles and row-chunked planes with the
    # cross-chunk carry path.
    loss_tiled = jax.block_until_ready(
        total_variation_loss(results, kernel, tile_bytes=8 * 1024))

    for name, val in (("default", loss), ("tiled", loss_tiled)):
        if not jnp.allclose(val, ref, rtol=1e-4, atol=1e-5):
            raise AssertionError(f"mismatch ({name}): pallas={val} ref={ref}")

    print("KERNEL_OK")
</pallas_src>

<mosaic_0001>
module attributes {stable_mosaic.version = 11 : i64} {
  func.func @_tv_tile_kernel(%arg0: i32, %arg1: i32, %arg2: memref<9x256xf32, #tpu.memory_space<vmem>>, %arg3: memref<2x256xf32, #tpu.memory_space<vmem>>, %arg4: memref<1x8x128xf32, #tpu.memory_space<vmem>>, %arg5: memref<9x16xf32, #tpu.memory_space<vmem>>) attributes {dimension_semantics = [#tpu.dimension_semantics<parallel>, #tpu.dimension_semantics<arbitrary>], iteration_bounds = array<i64: 1, 1>, scalar_prefetch = 0 : i64, scratch_operands = 1 : i64, tpu.core_type = #tpu.core_type<tc>, window_params = [{transform_indices = @transform_0, window_bounds = array<i64: 9, 256>}, {pipeline_mode = #tpu.pipeline_mode<synchronous>, transform_indices = @transform_1, window_bounds = array<i64: 2, 256>}, {transform_indices = @transform_2, window_bounds = array<i64: 1, 8, 128>}]} {
    %c0 = arith.constant 0 : index
    %c0_0 = arith.constant 0 : index
    %0 = vector.load %arg2[%c0, %c0_0] : memref<9x256xf32, #tpu.memory_space<vmem>>, vector<9x256xf32>
    %c0_1 = arith.constant 0 : index
    %c0_2 = arith.constant 0 : index
    %1 = vector.load %arg3[%c0_1, %c0_2] : memref<2x256xf32, #tpu.memory_space<vmem>>, vector<1x256xf32>
    %c1 = arith.constant 1 : index
    %c0_3 = arith.constant 0 : index
    %2 = vector.load %arg3[%c1, %c0_3] : memref<2x256xf32, #tpu.memory_space<vmem>>, vector<1x256xf32>
    %c1_i32 = arith.constant 1 : i32
    %3 = tpu.dynamic_rotate %0 by %c1_i32 dim 1 : vector<9x256xf32>, i32 -> vector<9x256xf32>
    %4 = vector.broadcast %1 : vector<1x256xf32> to vector<9x256xf32>
    %5 = arith.mulf %3, %4 : vector<9x256xf32>
    %c16_i32 = arith.constant 16 : i32
    %6 = tpu.dynamic_rotate %0 by %c16_i32 dim 1 : vector<9x256xf32>, i32 -> vector<9x256xf32>
    %7 = arith.addf %6, %5 : vector<9x256xf32>
    %cst = arith.constant 2.000000e+00 : f32
    %8 = vector.broadcast %cst : f32 to vector<9x256xf32>
    %9 = arith.mulf %8, %0 : vector<9x256xf32>
    %10 = arith.subf %7, %9 : vector<9x256xf32>
    %11 = math.absf %10 : vector<9x256xf32>
    %12 = vector.broadcast %2 : vector<1x256xf32> to vector<9x256xf32>
    %13 = arith.mulf %11, %12 : vector<9x256xf32>
    %cst_4 = arith.constant 1.000000e+00 : f32
    %14 = vector.broadcast %cst_4 : f32 to vector<1x9xf32>
    %cst_5 = arith.constant dense<0.000000e+00> : vector<1x256xf32>
    %15 = tpu.matmul %14, %13, %cst_5 {dimension_numbers = #tpu.dot_dimension_numbers<[1], [0], [0], [1], [0, 0, 1, 1], [], []>} : vector<1x9xf32>, vector<9x256xf32>, vector<1x256xf32> -> vector<1x256xf32>
    %c0_i32 = arith.constant 0 : i32
    %16 = arith.cmpi eq, %arg1, %c0_i32 : i32
    %17 = arith.extui %16 : i1 to i32
    %c0_i32_6 = arith.constant 0 : i32
    %18 = arith.cmpi ne, %17, %c0_i32_6 : i32
    scf.if %18 {
      %cst_22 = arith.constant 0.000000e+00 : f32
      %45 = vector.broadcast %cst_22 : f32 to vector<9x16xf32>
      %c0_23 = arith.constant 0 : index
      %c0_24 = arith.constant 0 : index
      %46 = vector.load %arg5[%c0_23, %c0_24] : memref<9x16xf32, #tpu.memory_space<vmem>>, vector<9x16xf32>
      tpu.vector_store %arg5[%c0_23, %c0_24], %45 {strides = array<i32>} : memref<9x16xf32, #tpu.memory_space<vmem>>, vector<9x16xf32>,
    } else {
    }
    %c0_7 = arith.constant 0 : index
    %c0_8 = arith.constant 0 : index
    %19 = vector.load %arg5[%c0_7, %c0_8] : memref<9x16xf32, #tpu.memory_space<vmem>>, vector<9x16xf32>
    %20 = vector.extract_strided_slice %5 {offsets = [0, 0], sizes = [9, 16], strides = [1, 1]} : vector<9x256xf32> to vector<9x16xf32>
    %21 = arith.addf %19, %20 : vector<9x16xf32>
    %22 = vector.extract_strided_slice %0 {offsets = [0, 0], sizes = [9, 16], strides = [1, 1]} : vector<9x256xf32> to vector<9x16xf32>
    %cst_9 = arith.constant 2.000000e+00 : f32
    %23 = vector.broadcast %cst_9 : f32 to vector<9x16xf32>
    %24 = arith.mulf %23, %22 : vector<9x16xf32>
    %25 = arith.subf %21, %24 : vector<9x16xf32>
    %26 = vector.extract_strided_slice %0 {offsets = [0, 240], sizes = [9, 16], strides = [1, 1]} : vector<9x256xf32> to vector<9x16xf32>
    %c0_10 = arith.constant 0 : index
    %c0_11 = arith.constant 0 : index
    %27 = vector.load %arg5[%c0_10, %c0_11] : memref<9x16xf32, #tpu.memory_space<vmem>>, vector<9x16xf32>
    tpu.vector_store %arg5[%c0_10, %c0_11], %26 {strides = array<i32>} : memref<9x16xf32, #tpu.memory_space<vmem>>, vector<9x16xf32>,
    %28 = vector.shape_cast %15 : vector<1x256xf32> to vector<1x1x256xf32>
    %cst_12 = arith.constant dense<0.000000e+00> : vector<1xf32>
    %29 = vector.multi_reduction <add>, %28, %cst_12 [1, 2] : vector<1x1x256xf32> to vector<1xf32>
    %30 = vector.shape_cast %29 : vector<1xf32> to vector<1x1x1xf32>
    %31 = vector.extract %30[0, 0, 0] : f32 from vector<1x1x1xf32>
    %32 = math.absf %25 : vector<9x16xf32>
    %33 = vector.shape_cast %32 : vector<9x16xf32> to vector<1x9x16xf32>
    %cst_13 = arith.constant dense<0.000000e+00> : vector<1xf32>
    %34 = vector.multi_reduction <add>, %33, %cst_13 [1, 2] : vector<1x9x16xf32> to vector<1xf32>
    %35 = vector.shape_cast %34 : vector<1xf32> to vector<1x1x1xf32>
    %36 = vector.extract %35[0, 0, 0] : f32 from vector<1x1x1xf32>
    %37 = arith.addf %31, %36 : f32
    %c0_i32_14 = arith.constant 0 : i32
    %38 = arith.cmpi eq, %arg1, %c0_i32_14 : i32
    %39 = arith.extui %38 : i1 to i32
    %c0_i32_15 = arith.constant 0 : i32
    %40 = arith.cmpi ne, %39, %c0_i32_15 : i32
    scf.if %40 {
      %cst_22 = arith.constant 0.000000e+00 : f32
      %45 = vector.broadcast %cst_22 : f32 to vector<1x8x128xf32>
      %c0_23 = arith.constant 0 : index
      %c0_24 = arith.constant 0 : index
      %c0_25 = arith.constant 0 : index
      %46 = vector.load %arg4[%c0_23, %c0_24, %c0_25] : memref<1x8x128xf32, #tpu.memory_space<vmem>>, vector<1x8x128xf32>
      tpu.vector_store %arg4[%c0_23, %c0_24, %c0_25], %45 {strides = array<i32>} : memref<1x8x128xf32, #tpu.memory_space<vmem>>, vector<1x8x128xf32>,
    } else {
    }
    %c0_16 = arith.constant 0 : index
    %c0_17 = arith.constant 0 : index
    %c0_18 = arith.constant 0 : index
    %41 = vector.load %arg4[%c0_16, %c0_17, %c0_18] : memref<1x8x128xf32, #tpu.memory_space<vmem>>, vector<1x8x128xf32>
    %42 = vector.broadcast %37 : f32 to vector<1x8x128xf32>
    %43 = arith.addf %41, %42 : vector<1x8x128xf32>
    %c0_19 = arith.constant 0 : index
    %c0_20 = arith.constant 0 : index
    %c0_21 = arith.constant 0 : index
    %44 = vector.load %arg4[%c0_19, %c0_20, %c0_21] : memref<1x8x128xf32, #tpu.memory_space<vmem>>, vector<1x8x128xf32>
    tpu.vector_store %arg4[%c0_19, %c0_20, %c0_21], %43 {strides = array<i32>} : memref<1x8x128xf32, #tpu.memory_space<vmem>>, vector<1x8x128xf32>,
    return
  }
  func.func @transform_0(%arg0: i32, %arg1: i32) -> (i32, i32) {
    %c0_i32 = arith.constant 0 : i32
    return %arg0, %arg1 : i32, i32
  }
  func.func @transform_1(%arg0: i32, %arg1: i32) -> (i32, i32) {
    %c0_i32 = arith.constant 0 : i32
    %c0_i32_0 = arith.constant 0 : i32
    %c0_i32_1 = arith.constant 0 : i32
    return %c0_i32, %c0_i32_0 : i32, i32
  }
  func.func @transform_2(%arg0: i32, %arg1: i32) -> (i32, i32, i32) {
    %c0_i32 = arith.constant 0 : i32
    %c0_i32_0 = arith.constant 0 : i32
    %c0_i32_1 = arith.constant 0 : i32
    return %arg0, %c0_i32, %c0_i32_0 : i32, i32, i32
  }
}

</mosaic_0001>

<llo_original>
// kernel: tpu_custom_call.1
$region0: #{tpu_custom_call.1}
  #allocation0 [shape = 'u32[]', space=smem, size = 0x4, offset = 0x4, fixed_abs, tag = 'smem constant byte address 0x4 - core index']
  #allocation1 [shape = 'u32[72,128]{1,0:T(1,128)}', space=vmem, size = 0x9000, scoped, tag = 'internal scratch']
  #allocation2 [shape = 'f32[9,16]{1,0:T(8,128)}', space=vmem, size = 0x2000, scoped, tag = 'scratch operand']
  %s0 = inlined_call_operand.hbm [shape: f32[9,256], index: 0, kind: input, shape index: {}]
  %s1 = inlined_call_operand.hbm [shape: f32[2,256], index: 1, kind: input, shape index: {}]
  %s2 = inlined_call_operand.hbm [shape: f32[1,8,128], index: 2, kind: output, shape index: {}]
  %s3 = sld [smem:[#allocation0]]
  $region34: #{tpu_custom_call.1} parent=0
    _
  %s5 = ssub.s32 1, %s3
  %s6 = scalar_select 0, %s5, %s3
  $region1: #{tpu_custom_call.1} parent=0
    #allocation3 [shape = 'u8[16384]{0}', space=vmem, size = 0x4000, scoped, tag = 'input window, operand 0, single buffered']
    #allocation4 [shape = 's32[1]{0}', space=sflag, size = 0x4, scoped, tag = 'scoped memory for tpu_custom_call.1']
    #allocation5 [shape = 's32[1]{0}', space=sflag, size = 0x4, scoped, tag = 'scoped memory for tpu_custom_call.1']
    #allocation6 [shape = 'u8[2048]{0}', space=vmem, size = 0x800, scoped, tag = 'input window, operand 1, single buffered']
    #allocation7 [shape = 's32[1]{0}', space=sflag, size = 0x4, scoped, tag = 'scoped memory for tpu_custom_call.1']
    #allocation8 [shape = 'u8[4096]{0}', space=vmem, size = 0x1000, scoped, tag = 'output window, operand 0, single buffered']
    %7 = vsyncpa [#allocation4], 0
    %8 = vsyncpa [#allocation7], 0
    %9 = vsyncpa [#allocation5], 0
    // Predicated region
    $region2: #{tpu_custom_call.1} parent=1 // pred_check
      _
    $region3: #{tpu_custom_call.1} parent=1 // pred_check_branch
      %11 = sbr.rel (0) target = $region5
    $region4: #{tpu_custom_call.1} parent=1 // pred_region
      %13 = vsyncadd [#allocation4], 0
      %s14 = sshll.u32 %s0, 4
      %s15 = int_to_ptr.hbm [resolvable:$true] %s14
      %s16 = sshll.u32 [#allocation3], 4
      %s17 = int_to_ptr.vmem [resolvable:$true] %s16
      %22 = dma.hbm_to_vmem [thread:$0]  %s15, 512, %s17, [#allocation4], 256, 256, 16
    $region5: #{tpu_custom_call.1} parent=1 // pred_fallthru
      _
    // Predicated region
    $region6: #{tpu_custom_call.1} parent=1 // pred_check
      _
    $region7: #{tpu_custom_call.1} parent=1 // pred_check_branch
      %24 = sbr.rel (0) target = $region9
    $region8: #{tpu_custom_call.1} parent=1 // pred_region
      %26 = vsyncadd [#allocation7], 0
      %s28 = sshll.u32 %s1, 4
      %s29 = int_to_ptr.hbm [resolvable:$true] %s28
      %s30 = sshll.u32 [#allocation6], 4
      %s31 = int_to_ptr.vmem [resolvable:$true] %s30
      %33 = dma.hbm_to_vmem [thread:$0]  %s29, 64, %s31, [#allocation7]
    $region9: #{tpu_custom_call.1} parent=1 // pred_fallthru
      _
    // Predicated region
    $region10: #{tpu_custom_call.1} parent=1 // pred_check
      _
    $region11: #{tpu_custom_call.1} parent=1 // pred_check_branch
      %35 = sbr.rel (0) target = $region13
    $region12: #{tpu_custom_call.1} parent=1 // pred_region
      %37 = dma.done [#allocation4], 512
    $region13: #{tpu_custom_call.1} parent=1 // pred_fallthru
      _
    // Predicated region
    $region14: #{tpu_custom_call.1} parent=1 // pred_check
      _
    $region15: #{tpu_custom_call.1} parent=1 // pred_check_branch
      %39 = sbr.rel (0) target = $region17
    $region16: #{tpu_custom_call.1} parent=1 // pred_region
      %41 = dma.done [#allocation7], 64
    $region17: #{tpu_custom_call.1} parent=1 // pred_fallthru
      _
    %v42 = vld [vmem:[#allocation3] sm:$0xff]
    %v43 = vld [vmem:[#allocation3 + $0x8] sm:$0xff]
    %v44 = vld [vmem:[#allocation3 + $0x10] sm:$0x1]
    %v45 = vld [vmem:[#allocation3 + $0x18] sm:$0x1]
    %v46 = vld [vmem:[#allocation6] ss:$2 sm:$0x3]
    %s47 = scalar_lea.vmem [#allocation6], 1
    %v48 = vld [vmem:[%s47] ss:$2 sm:$0x3]
    %49 = vrot.lane.b32.xlu0 %v42, 1
    %v50 = vpop.permute.xlu0 %49
    %51 = vrot.lane.b32.xlu0 %v44, 1
    %v52 = vpop.permute.xlu0 %51
    %53 = vrot.lane.b32.xlu0 %v43, 1
    %v54 = vpop.permute.xlu0 %53
    %55 = vrot.lane.b32.xlu0 %v45, 1
    %v56 = vpop.permute.xlu0 %55
    %v57 = vlaneseq
    %v58 = vand.u32 %v57, 127
    %vm59 = vcmp.lt.s32.totalorder %v58, 1
    %v60 = vsel %vm59, %v50, %v54
    %v61 = vsel %vm59, %v52, %v56
    %v62 = vsel %vm59, %v54, %v50
    %v63 = vsel %vm59, %v56, %v52
    %v65 = vperm.slane %v46, 0
    %v66 = vperm.slane %v46, 1
    %v69 = vmul.f32 %v62, %v65
    %v70 = vmul.f32 %v60, %v66
    %v71 = vmul.f32 %v63, %v65
    %v72 = vmul.f32 %v61, %v66
    %73 = vrot.lane.b32.xlu0 %v42, 16
    %v74 = vpop.permute.xlu0 %73
    %75 = vrot.lane.b32.xlu0 %v44, 16
    %v76 = vpop.permute.xlu0 %75
    %77 = vrot.lane.b32.xlu0 %v43, 16
    %v78 = vpop.permute.xlu0 %77
    %79 = vrot.lane.b32.xlu0 %v45, 16
    %v80 = vpop.permute.xlu0 %79
    %vm81 = vcmp.lt.s32.totalorder %v58, 16
    %v82 = vsel %vm81, %v74, %v78
    %v83 = vsel %vm81, %v76, %v80
    %v84 = vsel %vm81, %v78, %v74
    %v85 = vsel %vm81, %v80, %v76
    %v86 = vadd.f32 %v84, %v69
    %v87 = vadd.f32 %v82, %v70
    %v88 = vadd.f32 %v85, %v71
    %v89 = vadd.f32 %v83, %v72
    %v90 = vmul.f32 %v42, 2.0
    %v91 = vmul.f32 %v43, 2.0
    %v92 = vmul.f32 %v44, 2.0
    %v93 = vmul.f32 %v45, 2.0
    %v94 = vsub.f32 %v86, %v90
    %v95 = vsub.f32 %v87, %v91
    %v96 = vsub.f32 %v88, %v92
    %v97 = vsub.f32 %v89, %v93
    %v98 = vand.u32 2147483647, %v94
    %v99 = vand.u32 2147483647, %v95
    %v100 = vand.u32 2147483647, %v96
    %v101 = vand.u32 2147483647, %v97
    %v103 = vperm.slane %v48, 0
    %v104 = vperm.slane %v48, 1
    %v107 = vmul.f32 %v98, %v103
    %v108 = vmul.f32 %v99, %v104
    %v109 = vmul.f32 %v100, %v103
    %v110 = vmul.f32 %v101, %v104
    %vm111 = vcmask 72704
    %v113 = vsel %vm111, 1.0, 0
    %vm115 = vcmask 1040384
    %v117 = vsel %vm115, %v109, 0
    %v120 = vsel %vm115, %v110, 0
    %122 = vmatpush.msra.mxu0 0.0
    %123 = vmatpush.msra.mxu0 0.0
    %124 = vmatpush.msra.mxu0 0.0
    %125 = vmatpush.msra.mxu0 0.0
    %126 = vmatpush.msra.mxu0 0.0
    %127 = vmatpush.msra.mxu0 0.0
    %128 = vmatpush.msra.mxu0 0.0
    %129 = vmatpush.msra.mxu0 0.0
    %130 = vmatpush.msra.mxu0 0.0
    %131 = vmatpush.msra.mxu0 0.0
    %132 = vmatpush.msra.mxu0 0.0
    %133 = vmatpush.msra.mxu0 0.0
    %134 = vmatpush.msra.mxu0 0.0
    %135 = vmatpush.msra.mxu0 0.0
    %136 = vmatpush.msra.mxu0 %v117
    %137 = vmatpush.msra.mxu0 %v107
    %138 = vmatmul.f32.gmra.mxu0 %v113
    %v139 = vpop.f32.mrf.mxu0
    %v140 = vadd.f32 0.0, %v139
    %141 = vdwg.mxu0
    %142 = vmatpush.msra.mxu0 0.0
    %143 = vmatpush.msra.mxu0 0.0
    %144 = vmatpush.msra.mxu0 0.0
    %145 = vmatpush.msra.mxu0 0.0
    %146 = vmatpush.msra.mxu0 0.0
    %147 = vmatpush.msra.mxu0 0.0
    %148 = vmatpush.msra.mxu0 0.0
    %149 = vmatpush.msra.mxu0 0.0
    %150 = vmatpush.msra.mxu0 0.0
    %151 = vmatpush.msra.mxu0 0.0
    %152 = vmatpush.msra.mxu0 0.0
    %153 = vmatpush.msra.mxu0 0.0
    %154 = vmatpush.msra.mxu0 0.0
    %155 = vmatpush.msra.mxu0 0.0
    %156 = vmatpush.msra.mxu0 %v120
    %157 = vmatpush.msra.mxu0 %v108
    %158 = vmatmul.f32.gmra.mxu0 %v113
    %v159 = vpop.f32.mrf.mxu0
    %v160 = vadd.f32 0.0, %v159
    %161 = vdwg.mxu0
    %p162 = scmp.eq.s32.totalorder 0, 0
    // Predicated region
    $region18: #{tpu_custom_call.1} parent=1 // pred_check
      %p163 = pneg %p162
    $region19: #{tpu_custom_call.1} parent=1 // pred_check_branch
      %165 = sbr.rel (%p163) target = $region21
    $region20: #{tpu_custom_call.1} parent=1 // pred_region
      %vm166 = vcmask 130048
      %167 = vst.msk [vmem:[#allocation2] sm:$0xff] %vm166, 0.0
      %vm168 = vcmask 122880
      %169 = vst.msk [vmem:[#allocation2 + $0x8] sm:$0x1] %vm168, 0.0
    $region21: #{tpu_custom_call.1} parent=1 // pred_fallthru
      _
    %v170 = vld [vmem:[#allocation2] sm:$0xff]
    %v171 = vld [vmem:[#allocation2 + $0x8] sm:$0x1]
    %v172 = vadd.f32 %v170, %v69
    %v173 = vadd.f32 %v171, %v71
    %v174 = vsub.f32 %v172, %v90
    %v175 = vsub.f32 %v173, %v92
    %178 = vrot.lane.b32.xlu0 %v43, 16
    %v179 = vpop.permute.xlu0 %178
    %180 = vrot.lane.b32.xlu0 %v45, 16
    %v181 = vpop.permute.xlu0 %180
    %vm184 = vcmask 130048
    %185 = vst.msk [vmem:[#allocation2] sm:$0xff] %vm184, %v179
    %vm186 = vcmask 122880
    %187 = vst.msk [vmem:[#allocation2 + $0x8] sm:$0x1] %vm186, %v181
    %v188 = vsel %vm115, %v140, 0.0
    %v189 = vsel %vm115, %v160, 0.0
    %v190 = vadd.f32 %v188, %v189
    %191 = vadd.xlane.f32.xlu0 %v190
    %v192 = vpop.xlane.xlu0 %191
    %v193 = vrot.slane %v192, 4
    %v194 = vadd.f32 %v192, %v193
    %v195 = vrot.slane %v194, 2
    %v196 = vadd.f32 %v194, %v195
    %v197 = vrot.slane %v196, 1
    %v198 = vadd.f32 %v196, %v197
    %s199 = vtos %v198
    %v200 = vand.u32 2147483647, %v174
    %v201 = vand.u32 2147483647, %v175
    %v202 = vsel %vm184, %v200, 0.0
    %v203 = vsel %vm186, %v201, 0.0
    %v204 = vadd.f32 %v202, %v203
    %205 = vadd.xlane.f32.xlu0 %v204
    %v206 = vpop.xlane.xlu0 %205
    %v207 = vrot.slane %v206, 4
    %v208 = vadd.f32 %v206, %v207
    %v209 = vrot.slane %v208, 2
    %v210 = vadd.f32 %v208, %v209
    %v211 = vrot.slane %v210, 1
    %v212 = vadd.f32 %v210, %v211
    %s213 = vtos %v212
    %s214 = sadd.f32 %s199, %s213
    // Predicated region
    $region22: #{tpu_custom_call.1} parent=1 // pred_check
      %p215 = pneg %p162
    $region23: #{tpu_custom_call.1} parent=1 // pred_check_branch
      %217 = sbr.rel (%p215) target = $region25
    $region24: #{tpu_custom_call.1} parent=1 // pred_region
      %218 = vst [vmem:[#allocation8] sm:$0xff] 0.0
    $region25: #{tpu_custom_call.1} parent=1 // pred_fallthru
      _
    %v219 = vld [vmem:[#allocation8] sm:$0xff]
    %v220 = vstv %s214
    %v221 = vadd.f32 %v219, %v220
    %222 = vst [vmem:[#allocation8] sm:$0xff] %v221
    // Predicated region
    $region26: #{tpu_custom_call.1} parent=1 // pred_check
      _
    $region27: #{tpu_custom_call.1} parent=1 // pred_check_branch
      %224 = sbr.rel (0) target = $region29
    $region28: #{tpu_custom_call.1} parent=1 // pred_region
      %226 = vsyncadd [#allocation5], 0
      %s228 = sshll.u32 [#allocation8], 4
      %s229 = int_to_ptr.vmem [resolvable:$true] %s228
      %s230 = sshll.u32 %s2, 4
      %s231 = int_to_ptr.hbm [resolvable:$true] %s230
      %233 = dma.vmem_to_hbm [thread:$0]  %s229, 128, %s231, [#allocation5]
    $region29: #{tpu_custom_call.1} parent=1 // pred_fallthru
      _
    // Predicated region
    $region30: #{tpu_custom_call.1} parent=1 // pred_check
      _
    $region31: #{tpu_custom_call.1} parent=1 // pred_check_branch
      %235 = sbr.rel (0) target = $region33
    $region32: #{tpu_custom_call.1} parent=1 // pred_region
      %237 = dma.done [#allocation5], 128
    $region33: #{tpu_custom_call.1} parent=1 // pred_fallthru
      _
    %238 = vsyncpa [#allocation4], 1
    %239 = vsyncpa [#allocation7], 1
    %240 = vsyncpa [#allocation5], 1

</llo_original>
